<compile_context>
chip_gen: v7x
topology: tpu7x:2x2x1
jax: 0.10.0
libtpu: 0.0.40
codegen_flags: <defaults>
</compile_context>

<pallas_src>
import functools

import jax
import jax.numpy as jnp
from jax import lax
from jax.experimental import pallas as pl
from jax.experimental.pallas import tpu as pltpu


def _sep_conv_kernel(x_ref, dww_ref, dwb_ref, pww_ref, pwb_ref, out_ref,
                     y_ref, *, stride, dilation, kh_size, kw_size,
                     row_tile, wo):
    # x_ref   : (1, C, Hp, Wp)      zero-padded input, one batch element
    # dww_ref : (KH*KW, C, TH, 1)   depthwise taps (pre-broadcast along TH)
    # dwb_ref : (C, TH, 1)          depthwise bias
    # pww_ref : (O, C)              pointwise 1x1 weight
    # pwb_ref : (O, 1)              pointwise bias
    # out_ref : (1, O, TH*Wo)       output row-tile, flattened spatial on lanes
    # y_ref   : (C, TH*Wo) f32      scratch: RHS of the pointwise matmul
    TH, Wo = row_tile, wo
    C = x_ref.shape[1]

    rt = pl.program_id(1)
    row0 = rt * (TH * stride)          # first padded-input row for this tile

    # Depthwise conv: accumulate KH*KW shifted taps on the VPU,
    # channels-major, W on the lane axis.
    acc = jnp.zeros((C, TH, Wo), jnp.float32)
    for i in range(kh_size):
        for j in range(kw_size):
            h0 = row0 + i * dilation
            w0 = j * dilation
            if stride == 1:
                patch = x_ref[0, :, pl.ds(h0, TH), pl.ds(w0, Wo)]
            else:
                patch = x_ref[0, :, pl.ds(h0, TH, stride),
                              pl.ds(w0, Wo, stride)]
            tap = dww_ref[i * kw_size + j]                    # (C, TH, 1)
            acc = acc + patch.astype(jnp.float32) * tap.astype(jnp.float32)
    acc = acc + dwb_ref[...].astype(jnp.float32)              # (C, TH, 1)

    # Flatten (TH, Wo) onto the lane axis via the staging scratch so the
    # pointwise matmul result (O, TH*Wo) is produced / stored lane-dense.
    for r in range(TH):
        y_ref[:, pl.ds(r * Wo, Wo)] = acc[:, r, :]

    # Pointwise 1x1 conv == (O, C) x (C, TH*Wo) matmul on the MXU.
    out = jnp.dot(pww_ref[...].astype(jnp.float32), y_ref[...],
                  preferred_element_type=jnp.float32)         # (O, TH*Wo)
    out = out + pwb_ref[...].astype(jnp.float32)              # (O, 1) bcast
    out_ref[0, :, :] = out.astype(out_ref.dtype)


def _choose_row_tile(ho, wo):
    """Row tile TH dividing Ho, with TH*Wo a multiple of 128 (lane-dense)."""
    cands = [t for t in range(1, ho + 1)
             if ho % t == 0 and (t * wo) % 128 == 0 and t * wo <= 16384]
    if not cands:
        return ho                 # full extent is always a legal block shape
    multi = [t for t in cands if ho // t >= 2]   # >=2 row steps: pipelining
    return max(multi) if multi else max(cands)   # and v7x dual-TC utilization


def separable_conv2d(x_nchw, dw_weight, dw_bias, pw_weight, pw_bias,
                     *, stride=1, padding=0, dilation=1):
    """SeparableConv2d forward (PyTorch semantics).

    x_nchw    : (N, C, H, W)
    dw_weight : (C, 1, KH, KW)   depthwise conv weight (groups=C)
    dw_bias   : (C,)
    pw_weight : (O, C, 1, 1)     pointwise conv weight
    pw_bias   : (O,)
    returns   : (N, O, Ho, Wo)
    """
    N, C, H, W = x_nchw.shape
    KH, KW = int(dw_weight.shape[2]), int(dw_weight.shape[3])
    O = int(pw_weight.shape[0])

    Ho = (H + 2 * padding - dilation * (KH - 1) - 1) // stride + 1
    Wo = (W + 2 * padding - dilation * (KW - 1) - 1) // stride + 1
    Hp, Wp = H + 2 * padding, W + 2 * padding

    # Glue: zero padding + weight reshapes (plain JAX, no layout transposes).
    x_pad = jnp.pad(x_nchw, ((0, 0), (0, 0),
                             (padding, padding), (padding, padding)))

    TH = _choose_row_tile(Ho, Wo)
    n_row_tiles = Ho // TH

    dww = jnp.transpose(dw_weight[:, 0, :, :], (1, 2, 0)).reshape(KH * KW, C)
    dww = jnp.broadcast_to(dww[:, :, None, None], (KH * KW, C, TH, 1))
    dwb = jnp.broadcast_to(dw_bias.reshape(C, 1, 1), (C, TH, 1))
    pww = pw_weight[:, :, 0, 0]                       # (O, C)
    pwb = pw_bias.reshape(O, 1)                       # (O, 1)

    kernel = functools.partial(
        _sep_conv_kernel, stride=stride, dilation=dilation,
        kh_size=KH, kw_size=KW, row_tile=TH, wo=Wo)

    out_flat = pl.pallas_call(
        kernel,
        out_shape=jax.ShapeDtypeStruct((N, O, Ho * Wo), x_nchw.dtype),
        grid_spec=pltpu.PrefetchScalarGridSpec(
            num_scalar_prefetch=0,
            grid=(N, n_row_tiles),
            in_specs=[
                pl.BlockSpec((1, C, Hp, Wp), lambda n, r: (n, 0, 0, 0)),
                pl.BlockSpec((KH * KW, C, TH, 1), lambda n, r: (0, 0, 0, 0)),
                pl.BlockSpec((C, TH, 1), lambda n, r: (0, 0, 0)),
                pl.BlockSpec((O, C), lambda n, r: (0, 0)),
                pl.BlockSpec((O, 1), lambda n, r: (0, 0)),
            ],
            out_specs=pl.BlockSpec((1, O, TH * Wo), lambda n, r: (n, 0, r)),
            scratch_shapes=[pltpu.VMEM((C, TH * Wo), jnp.float32)],
        ),
        compiler_params=pltpu.CompilerParams(
            dimension_semantics=("parallel", "parallel"),
            vmem_limit_bytes=32 * 1024 * 1024,
        ),
    )(x_pad, dww, dwb, pww, pwb)

    return out_flat.reshape(N, O, Ho, Wo)


def _reference(x, dw_weight, dw_bias, pw_weight, pw_bias,
               *, stride, padding, dilation):
    C = x.shape[1]
    y = lax.conv_general_dilated(
        x, dw_weight,
        window_strides=(stride, stride),
        padding=((padding, padding), (padding, padding)),
        rhs_dilation=(dilation, dilation),
        feature_group_count=C,
        dimension_numbers=("NCHW", "OIHW", "NCHW"),
        precision=lax.Precision.HIGHEST)
    y = y + dw_bias.reshape(1, -1, 1, 1)
    z = lax.conv_general_dilated(
        y, pw_weight,
        window_strides=(1, 1),
        padding=((0, 0), (0, 0)),
        dimension_numbers=("NCHW", "OIHW", "NCHW"),
        precision=lax.Precision.HIGHEST)
    return z + pw_bias.reshape(1, -1, 1, 1)


if __name__ == "__main__":
    # SeparableConv2d(in_channels=4, out_channels=8, kernel_size=3,
    #                 stride=1, padding=1, dilation=1, bias=True)
    N, C, H, W = 2, 4, 16, 16
    O, K = 8, 3
    stride, padding, dilation = 1, 1, 1

    key = jax.random.PRNGKey(0)
    kx, k1, k2, k3, k4 = jax.random.split(key, 5)

    x = jax.random.normal(kx, (N, C, H, W), dtype=jnp.float32)
    dw_weight = 0.1 * jax.random.normal(k1, (C, 1, K, K), dtype=jnp.float32)
    dw_bias = 0.1 * jax.random.normal(k2, (C,), dtype=jnp.float32)
    pw_weight = 0.1 * jax.random.normal(k3, (O, C, 1, 1), dtype=jnp.float32)
    pw_bias = 0.1 * jax.random.normal(k4, (O,), dtype=jnp.float32)

    out = separable_conv2d(x, dw_weight, dw_bias, pw_weight, pw_bias,
                           stride=stride, padding=padding, dilation=dilation)
    out = jax.block_until_ready(out)

    ref = _reference(x, dw_weight, dw_bias, pw_weight, pw_bias,
                     stride=stride, padding=padding, dilation=dilation)
    assert out.shape == (N, O, H, W), out.shape
    assert jnp.allclose(out, ref, atol=1e-3, rtol=1e-3), \
        float(jnp.max(jnp.abs(out - ref)))

    print("KERNEL_OK")
</pallas_src>

<mosaic_0001>
module attributes {stable_mosaic.version = 11 : i64} {
  func.func @_sep_conv_kernel(%arg0: i32, %arg1: i32, %arg2: memref<1x4x18x18xf32, #tpu.memory_space<vmem>>, %arg3: memref<9x4x8x1xf32, #tpu.memory_space<vmem>>, %arg4: memref<4x8x1xf32, #tpu.memory_space<vmem>>, %arg5: memref<8x4xf32, #tpu.memory_space<vmem>>, %arg6: memref<8x1xf32, #tpu.memory_space<vmem>>, %arg7: memref<1x8x128xf32, #tpu.memory_space<vmem>>, %arg8: memref<4x128xf32, #tpu.memory_space<vmem>>) attributes {dimension_semantics = [#tpu.dimension_semantics<parallel>, #tpu.dimension_semantics<parallel>], iteration_bounds = array<i64: 2, 2>, scalar_prefetch = 0 : i64, scratch_operands = 1 : i64, tpu.core_type = #tpu.core_type<tc>, window_params = [{transform_indices = @transform_0, window_bounds = array<i64: 1, 4, 18, 18>}, {pipeline_mode = #tpu.pipeline_mode<synchronous>, transform_indices = @transform_1, window_bounds = array<i64: 9, 4, 8, 1>}, {pipeline_mode = #tpu.pipeline_mode<synchronous>, transform_indices = @transform_2, window_bounds = array<i64: 4, 8, 1>}, {pipeline_mode = #tpu.pipeline_mode<synchronous>, transform_indices = @transform_3, window_bounds = array<i64: 8, 4>}, {pipeline_mode = #tpu.pipeline_mode<synchronous>, transform_indices = @transform_4, window_bounds = array<i64: 8, 1>}, {transform_indices = @transform_5, window_bounds = array<i64: 1, 8, 128>}]} {
    %c8_i32 = arith.constant 8 : i32
    %0 = arith.muli %arg1, %c8_i32 : i32
    %cst = arith.constant 0.000000e+00 : f32
    %1 = vector.broadcast %cst : f32 to vector<4x8x16xf32>
    %c0_i32 = arith.constant 0 : i32
    %2 = arith.addi %0, %c0_i32 : i32
    %c0 = arith.constant 0 : index
    %c0_0 = arith.constant 0 : index
    %3 = arith.index_cast %2 : i32 to index
    %c0_1 = arith.constant 0 : index
    %4 = vector.load %arg2[%c0, %c0_0, %3, %c0_1] : memref<1x4x18x18xf32, #tpu.memory_space<vmem>>, vector<1x4x8x16xf32>
    %5 = vector.shape_cast %4 : vector<1x4x8x16xf32> to vector<4x8x16xf32>
    %c0_2 = arith.constant 0 : index
    %c0_3 = arith.constant 0 : index
    %c0_4 = arith.constant 0 : index
    %c0_5 = arith.constant 0 : index
    %6 = vector.load %arg3[%c0_2, %c0_3, %c0_4, %c0_5] : memref<9x4x8x1xf32, #tpu.memory_space<vmem>>, vector<1x4x8x1xf32>
    %7 = vector.shape_cast %6 : vector<1x4x8x1xf32> to vector<4x8x1xf32>
    %8 = vector.broadcast %7 : vector<4x8x1xf32> to vector<4x8x16xf32>
    %9 = arith.mulf %5, %8 : vector<4x8x16xf32>
    %10 = arith.addf %1, %9 : vector<4x8x16xf32>
    %c0_i32_6 = arith.constant 0 : i32
    %11 = arith.addi %0, %c0_i32_6 : i32
    %c0_7 = arith.constant 0 : index
    %c0_8 = arith.constant 0 : index
    %12 = arith.index_cast %11 : i32 to index
    %c1 = arith.constant 1 : index
    %13 = vector.load %arg2[%c0_7, %c0_8, %12, %c1] : memref<1x4x18x18xf32, #tpu.memory_space<vmem>>, vector<1x4x8x16xf32>
    %14 = vector.shape_cast %13 : vector<1x4x8x16xf32> to vector<4x8x16xf32>
    %c1_9 = arith.constant 1 : index
    %c0_10 = arith.constant 0 : index
    %c0_11 = arith.constant 0 : index
    %c0_12 = arith.constant 0 : index
    %15 = vector.load %arg3[%c1_9, %c0_10, %c0_11, %c0_12] : memref<9x4x8x1xf32, #tpu.memory_space<vmem>>, vector<1x4x8x1xf32>
    %16 = vector.shape_cast %15 : vector<1x4x8x1xf32> to vector<4x8x1xf32>
    %17 = vector.broadcast %16 : vector<4x8x1xf32> to vector<4x8x16xf32>
    %18 = arith.mulf %14, %17 : vector<4x8x16xf32>
    %19 = arith.addf %10, %18 : vector<4x8x16xf32>
    %c0_i32_13 = arith.constant 0 : i32
    %20 = arith.addi %0, %c0_i32_13 : i32
    %c0_14 = arith.constant 0 : index
    %c0_15 = arith.constant 0 : index
    %21 = arith.index_cast %20 : i32 to index
    %c2 = arith.constant 2 : index
    %22 = vector.load %arg2[%c0_14, %c0_15, %21, %c2] : memref<1x4x18x18xf32, #tpu.memory_space<vmem>>, vector<1x4x8x16xf32>
    %23 = vector.shape_cast %22 : vector<1x4x8x16xf32> to vector<4x8x16xf32>
    %c2_16 = arith.constant 2 : index
    %c0_17 = arith.constant 0 : index
    %c0_18 = arith.constant 0 : index
    %c0_19 = arith.constant 0 : index
    %24 = vector.load %arg3[%c2_16, %c0_17, %c0_18, %c0_19] : memref<9x4x8x1xf32, #tpu.memory_space<vmem>>, vector<1x4x8x1xf32>
    %25 = vector.shape_cast %24 : vector<1x4x8x1xf32> to vector<4x8x1xf32>
    %26 = vector.broadcast %25 : vector<4x8x1xf32> to vector<4x8x16xf32>
    %27 = arith.mulf %23, %26 : vector<4x8x16xf32>
    %28 = arith.addf %19, %27 : vector<4x8x16xf32>
    %c1_i32 = arith.constant 1 : i32
    %29 = arith.addi %0, %c1_i32 : i32
    %c0_20 = arith.constant 0 : index
    %c0_21 = arith.constant 0 : index
    %30 = arith.index_cast %29 : i32 to index
    %c0_22 = arith.constant 0 : index
    %31 = vector.load %arg2[%c0_20, %c0_21, %30, %c0_22] : memref<1x4x18x18xf32, #tpu.memory_space<vmem>>, vector<1x4x8x16xf32>
    %32 = vector.shape_cast %31 : vector<1x4x8x16xf32> to vector<4x8x16xf32>
    %c3 = arith.constant 3 : index
    %c0_23 = arith.constant 0 : index
    %c0_24 = arith.constant 0 : index
    %c0_25 = arith.constant 0 : index
    %33 = vector.load %arg3[%c3, %c0_23, %c0_24, %c0_25] : memref<9x4x8x1xf32, #tpu.memory_space<vmem>>, vector<1x4x8x1xf32>
    %34 = vector.shape_cast %33 : vector<1x4x8x1xf32> to vector<4x8x1xf32>
    %35 = vector.broadcast %34 : vector<4x8x1xf32> to vector<4x8x16xf32>
    %36 = arith.mulf %32, %35 : vector<4x8x16xf32>
    %37 = arith.addf %28, %36 : vector<4x8x16xf32>
    %c1_i32_26 = arith.constant 1 : i32
    %38 = arith.addi %0, %c1_i32_26 : i32
    %c0_27 = arith.constant 0 : index
    %c0_28 = arith.constant 0 : index
    %39 = arith.index_cast %38 : i32 to index
    %c1_29 = arith.constant 1 : index
    %40 = vector.load %arg2[%c0_27, %c0_28, %39, %c1_29] : memref<1x4x18x18xf32, #tpu.memory_space<vmem>>, vector<1x4x8x16xf32>
    %41 = vector.shape_cast %40 : vector<1x4x8x16xf32> to vector<4x8x16xf32>
    %c4 = arith.constant 4 : index
    %c0_30 = arith.constant 0 : index
    %c0_31 = arith.constant 0 : index
    %c0_32 = arith.constant 0 : index
    %42 = vector.load %arg3[%c4, %c0_30, %c0_31, %c0_32] : memref<9x4x8x1xf32, #tpu.memory_space<vmem>>, vector<1x4x8x1xf32>
    %43 = vector.shape_cast %42 : vector<1x4x8x1xf32> to vector<4x8x1xf32>
    %44 = vector.broadcast %43 : vector<4x8x1xf32> to vector<4x8x16xf32>
    %45 = arith.mulf %41, %44 : vector<4x8x16xf32>
    %46 = arith.addf %37, %45 : vector<4x8x16xf32>
    %c1_i32_33 = arith.constant 1 : i32
    %47 = arith.addi %0, %c1_i32_33 : i32
    %c0_34 = arith.constant 0 : index
    %c0_35 = arith.constant 0 : index
    %48 = arith.index_cast %47 : i32 to index
    %c2_36 = arith.constant 2 : index
    %49 = vector.load %arg2[%c0_34, %c0_35, %48, %c2_36] : memref<1x4x18x18xf32, #tpu.memory_space<vmem>>, vector<1x4x8x16xf32>
    %50 = vector.shape_cast %49 : vector<1x4x8x16xf32> to vector<4x8x16xf32>
    %c5 = arith.constant 5 : index
    %c0_37 = arith.constant 0 : index
    %c0_38 = arith.constant 0 : index
    %c0_39 = arith.constant 0 : index
    %51 = vector.load %arg3[%c5, %c0_37, %c0_38, %c0_39] : memref<9x4x8x1xf32, #tpu.memory_space<vmem>>, vector<1x4x8x1xf32>
    %52 = vector.shape_cast %51 : vector<1x4x8x1xf32> to vector<4x8x1xf32>
    %53 = vector.broadcast %52 : vector<4x8x1xf32> to vector<4x8x16xf32>
    %54 = arith.mulf %50, %53 : vector<4x8x16xf32>
    %55 = arith.addf %46, %54 : vector<4x8x16xf32>
    %c2_i32 = arith.constant 2 : i32
    %56 = arith.addi %0, %c2_i32 : i32
    %c0_40 = arith.constant 0 : index
    %c0_41 = arith.constant 0 : index
    %57 = arith.index_cast %56 : i32 to index
    %c0_42 = arith.constant 0 : index
    %58 = vector.load %arg2[%c0_40, %c0_41, %57, %c0_42] : memref<1x4x18x18xf32, #tpu.memory_space<vmem>>, vector<1x4x8x16xf32>
    %59 = vector.shape_cast %58 : vector<1x4x8x16xf32> to vector<4x8x16xf32>
    %c6 = arith.constant 6 : index
    %c0_43 = arith.constant 0 : index
    %c0_44 = arith.constant 0 : index
    %c0_45 = arith.constant 0 : index
    %60 = vector.load %arg3[%c6, %c0_43, %c0_44, %c0_45] : memref<9x4x8x1xf32, #tpu.memory_space<vmem>>, vector<1x4x8x1xf32>
    %61 = vector.shape_cast %60 : vector<1x4x8x1xf32> to vector<4x8x1xf32>
    %62 = vector.broadcast %61 : vector<4x8x1xf32> to vector<4x8x16xf32>
    %63 = arith.mulf %59, %62 : vector<4x8x16xf32>
    %64 = arith.addf %55, %63 : vector<4x8x16xf32>
    %c2_i32_46 = arith.constant 2 : i32
    %65 = arith.addi %0, %c2_i32_46 : i32
    %c0_47 = arith.constant 0 : index
    %c0_48 = arith.constant 0 : index
    %66 = arith.index_cast %65 : i32 to index
    %c1_49 = arith.constant 1 : index
    %67 = vector.load %arg2[%c0_47, %c0_48, %66, %c1_49] : memref<1x4x18x18xf32, #tpu.memory_space<vmem>>, vector<1x4x8x16xf32>
    %68 = vector.shape_cast %67 : vector<1x4x8x16xf32> to vector<4x8x16xf32>
    %c7 = arith.constant 7 : index
    %c0_50 = arith.constant 0 : index
    %c0_51 = arith.constant 0 : index
    %c0_52 = arith.constant 0 : index
    %69 = vector.load %arg3[%c7, %c0_50, %c0_51, %c0_52] : memref<9x4x8x1xf32, #tpu.memory_space<vmem>>, vector<1x4x8x1xf32>
    %70 = vector.shape_cast %69 : vector<1x4x8x1xf32> to vector<4x8x1xf32>
    %71 = vector.broadcast %70 : vector<4x8x1xf32> to vector<4x8x16xf32>
    %72 = arith.mulf %68, %71 : vector<4x8x16xf32>
    %73 = arith.addf %64, %72 : vector<4x8x16xf32>
    %c2_i32_53 = arith.constant 2 : i32
    %74 = arith.addi %0, %c2_i32_53 : i32
    %c0_54 = arith.constant 0 : index
    %c0_55 = arith.constant 0 : index
    %75 = arith.index_cast %74 : i32 to index
    %c2_56 = arith.constant 2 : index
    %76 = vector.load %arg2[%c0_54, %c0_55, %75, %c2_56] : memref<1x4x18x18xf32, #tpu.memory_space<vmem>>, vector<1x4x8x16xf32>
    %77 = vector.shape_cast %76 : vector<1x4x8x16xf32> to vector<4x8x16xf32>
    %c8 = arith.constant 8 : index
    %c0_57 = arith.constant 0 : index
    %c0_58 = arith.constant 0 : index
    %c0_59 = arith.constant 0 : index
    %78 = vector.load %arg3[%c8, %c0_57, %c0_58, %c0_59] : memref<9x4x8x1xf32, #tpu.memory_space<vmem>>, vector<1x4x8x1xf32>
    %79 = vector.shape_cast %78 : vector<1x4x8x1xf32> to vector<4x8x1xf32>
    %80 = vector.broadcast %79 : vector<4x8x1xf32> to vector<4x8x16xf32>
    %81 = arith.mulf %77, %80 : vector<4x8x16xf32>
    %82 = arith.addf %73, %81 : vector<4x8x16xf32>
    %c0_60 = arith.constant 0 : index
    %c0_61 = arith.constant 0 : index
    %c0_62 = arith.constant 0 : index
    %83 = vector.load %arg4[%c0_60, %c0_61, %c0_62] : memref<4x8x1xf32, #tpu.memory_space<vmem>>, vector<4x8x1xf32>
    %84 = vector.broadcast %83 : vector<4x8x1xf32> to vector<4x8x16xf32>
    %85 = arith.addf %82, %84 : vector<4x8x16xf32>
    %86 = vector.extract_strided_slice %85 {offsets = [0, 0, 0], sizes = [4, 1, 16], strides = [1, 1, 1]} : vector<4x8x16xf32> to vector<4x1x16xf32>
    %87 = vector.shape_cast %86 : vector<4x1x16xf32> to vector<4x16xf32>
    %c0_63 = arith.constant 0 : index
    %c0_64 = arith.constant 0 : index
    %88 = vector.load %arg8[%c0_63, %c0_64] : memref<4x128xf32, #tpu.memory_space<vmem>>, vector<4x16xf32>
    tpu.vector_store %arg8[%c0_63, %c0_64], %87 {strides = array<i32>} : memref<4x128xf32, #tpu.memory_space<vmem>>, vector<4x16xf32>,
    %89 = vector.extract_strided_slice %85 {offsets = [0, 1, 0], sizes = [4, 1, 16], strides = [1, 1, 1]} : vector<4x8x16xf32> to vector<4x1x16xf32>
    %90 = vector.shape_cast %89 : vector<4x1x16xf32> to vector<4x16xf32>
    %c0_65 = arith.constant 0 : index
    %c16 = arith.constant 16 : index
    %91 = vector.load %arg8[%c0_65, %c16] : memref<4x128xf32, #tpu.memory_space<vmem>>, vector<4x16xf32>
    tpu.vector_store %arg8[%c0_65, %c16], %90 {strides = array<i32>} : memref<4x128xf32, #tpu.memory_space<vmem>>, vector<4x16xf32>,
    %92 = vector.extract_strided_slice %85 {offsets = [0, 2, 0], sizes = [4, 1, 16], strides = [1, 1, 1]} : vector<4x8x16xf32> to vector<4x1x16xf32>
    %93 = vector.shape_cast %92 : vector<4x1x16xf32> to vector<4x16xf32>
    %c0_66 = arith.constant 0 : index
    %c32 = arith.constant 32 : index
    %94 = vector.load %arg8[%c0_66, %c32] : memref<4x128xf32, #tpu.memory_space<vmem>>, vector<4x16xf32>
    tpu.vector_store %arg8[%c0_66, %c32], %93 {strides = array<i32>} : memref<4x128xf32, #tpu.memory_space<vmem>>, vector<4x16xf32>,
    %95 = vector.extract_strided_slice %85 {offsets = [0, 3, 0], sizes = [4, 1, 16], strides = [1, 1, 1]} : vector<4x8x16xf32> to vector<4x1x16xf32>
    %96 = vector.shape_cast %95 : vector<4x1x16xf32> to vector<4x16xf32>
    %c0_67 = arith.constant 0 : index
    %c48 = arith.constant 48 : index
    %97 = vector.load %arg8[%c0_67, %c48] : memref<4x128xf32, #tpu.memory_space<vmem>>, vector<4x16xf32>
    tpu.vector_store %arg8[%c0_67, %c48], %96 {strides = array<i32>} : memref<4x128xf32, #tpu.memory_space<vmem>>, vector<4x16xf32>,
    %98 = vector.extract_strided_slice %85 {offsets = [0, 4, 0], sizes = [4, 1, 16], strides = [1, 1, 1]} : vector<4x8x16xf32> to vector<4x1x16xf32>
    %99 = vector.shape_cast %98 : vector<4x1x16xf32> to vector<4x16xf32>
    %c0_68 = arith.constant 0 : index
    %c64 = arith.constant 64 : index
    %100 = vector.load %arg8[%c0_68, %c64] : memref<4x128xf32, #tpu.memory_space<vmem>>, vector<4x16xf32>
    tpu.vector_store %arg8[%c0_68, %c64], %99 {strides = array<i32>} : memref<4x128xf32, #tpu.memory_space<vmem>>, vector<4x16xf32>,
    %101 = vector.extract_strided_slice %85 {offsets = [0, 5, 0], sizes = [4, 1, 16], strides = [1, 1, 1]} : vector<4x8x16xf32> to vector<4x1x16xf32>
    %102 = vector.shape_cast %101 : vector<4x1x16xf32> to vector<4x16xf32>
    %c0_69 = arith.constant 0 : index
    %c80 = arith.constant 80 : index
    %103 = vector.load %arg8[%c0_69, %c80] : memref<4x128xf32, #tpu.memory_space<vmem>>, vector<4x16xf32>
    tpu.vector_store %arg8[%c0_69, %c80], %102 {strides = array<i32>} : memref<4x128xf32, #tpu.memory_space<vmem>>, vector<4x16xf32>,
    %104 = vector.extract_strided_slice %85 {offsets = [0, 6, 0], sizes = [4, 1, 16], strides = [1, 1, 1]} : vector<4x8x16xf32> to vector<4x1x16xf32>
    %105 = vector.shape_cast %104 : vector<4x1x16xf32> to vector<4x16xf32>
    %c0_70 = arith.constant 0 : index
    %c96 = arith.constant 96 : index
    %106 = vector.load %arg8[%c0_70, %c96] : memref<4x128xf32, #tpu.memory_space<vmem>>, vector<4x16xf32>
    tpu.vector_store %arg8[%c0_70, %c96], %105 {strides = array<i32>} : memref<4x128xf32, #tpu.memory_space<vmem>>, vector<4x16xf32>,
    %107 = vector.extract_strided_slice %85 {offsets = [0, 7, 0], sizes = [4, 1, 16], strides = [1, 1, 1]} : vector<4x8x16xf32> to vector<4x1x16xf32>
    %108 = vector.shape_cast %107 : vector<4x1x16xf32> to vector<4x16xf32>
    %c0_71 = arith.constant 0 : index
    %c112 = arith.constant 112 : index
    %109 = vector.load %arg8[%c0_71, %c112] : memref<4x128xf32, #tpu.memory_space<vmem>>, vector<4x16xf32>
    tpu.vector_store %arg8[%c0_71, %c112], %108 {strides = array<i32>} : memref<4x128xf32, #tpu.memory_space<vmem>>, vector<4x16xf32>,
    %c0_72 = arith.constant 0 : index
    %c0_73 = arith.constant 0 : index
    %110 = vector.load %arg5[%c0_72, %c0_73] : memref<8x4xf32, #tpu.memory_space<vmem>>, vector<8x4xf32>
    %c0_74 = arith.constant 0 : index
    %c0_75 = arith.constant 0 : index
    %111 = vector.load %arg8[%c0_74, %c0_75] : memref<4x128xf32, #tpu.memory_space<vmem>>, vector<4x128xf32>
    %cst_76 = arith.constant dense<0.000000e+00> : vector<8x128xf32>
    %112 = tpu.matmul %110, %111, %cst_76 {dimension_numbers = #tpu.dot_dimension_numbers<[1], [0], [0], [1], [0, 0, 1, 1], [], []>} : vector<8x4xf32>, vector<4x128xf32>, vector<8x128xf32> -> vector<8x128xf32>
    %c0_77 = arith.constant 0 : index
    %c0_78 = arith.constant 0 : index
    %113 = vector.load %arg6[%c0_77, %c0_78] : memref<8x1xf32, #tpu.memory_space<vmem>>, vector<8x1xf32>
    %114 = vector.broadcast %113 : vector<8x1xf32> to vector<8x128xf32>
    %115 = arith.addf %112, %114 : vector<8x128xf32>
    %c0_79 = arith.constant 0 : index
    %c0_80 = arith.constant 0 : index
    %c0_81 = arith.constant 0 : index
    %116 = vector.load %arg7[%c0_79, %c0_80, %c0_81] : memref<1x8x128xf32, #tpu.memory_space<vmem>>, vector<1x8x128xf32>
    %117 = vector.shape_cast %116 : vector<1x8x128xf32> to vector<8x128xf32>
    %118 = vector.shape_cast %115 : vector<8x128xf32> to vector<1x8x128xf32>
    tpu.vector_store %arg7[%c0_79, %c0_80, %c0_81], %118 {strides = array<i32>} : memref<1x8x128xf32, #tpu.memory_space<vmem>>, vector<1x8x128xf32>,
    return
  }
  func.func @transform_0(%arg0: i32, %arg1: i32) -> (i32, i32, i32, i32) {
    %c0_i32 = arith.constant 0 : i32
    %c0_i32_0 = arith.constant 0 : i32
    %c0_i32_1 = arith.constant 0 : i32
    %c0_i32_2 = arith.constant 0 : i32
    return %arg0, %c0_i32, %c0_i32_0, %c0_i32_1 : i32, i32, i32, i32
  }
  func.func @transform_1(%arg0: i32, %arg1: i32) -> (i32, i32, i32, i32) {
    %c0_i32 = arith.constant 0 : i32
    %c0_i32_0 = arith.constant 0 : i32
    %c0_i32_1 = arith.constant 0 : i32
    %c0_i32_2 = arith.constant 0 : i32
    %c0_i32_3 = arith.constant 0 : i32
    return %c0_i32, %c0_i32_0, %c0_i32_1, %c0_i32_2 : i32, i32, i32, i32
  }
  func.func @transform_2(%arg0: i32, %arg1: i32) -> (i32, i32, i32) {
    %c0_i32 = arith.constant 0 : i32
    %c0_i32_0 = arith.constant 0 : i32
    %c0_i32_1 = arith.constant 0 : i32
    %c0_i32_2 = arith.constant 0 : i32
    return %c0_i32, %c0_i32_0, %c0_i32_1 : i32, i32, i32
  }
  func.func @transform_3(%arg0: i32, %arg1: i32) -> (i32, i32) {
    %c0_i32 = arith.constant 0 : i32
    %c0_i32_0 = arith.constant 0 : i32
    %c0_i32_1 = arith.constant 0 : i32
    return %c0_i32, %c0_i32_0 : i32, i32
  }
  func.func @transform_4(%arg0: i32, %arg1: i32) -> (i32, i32) {
    %c0_i32 = arith.constant 0 : i32
    %c0_i32_0 = arith.constant 0 : i32
    %c0_i32_1 = arith.constant 0 : i32
    return %c0_i32, %c0_i32_0 : i32, i32
  }
  func.func @transform_5(%arg0: i32, %arg1: i32) -> (i32, i32, i32) {
    %c0_i32 = arith.constant 0 : i32
    %c0_i32_0 = arith.constant 0 : i32
    return %arg0, %c0_i32, %arg1 : i32, i32, i32
  }
}

</mosaic_0001>

<llo_original>
// kernel: tpu_custom_call.1
$region0: #{tpu_custom_call.1}
  #allocation0 [shape = 'u32[]', space=smem, size = 0x4, offset = 0x4, fixed_abs, tag = 'smem constant byte address 0x4 - core index']
  #allocation1 [shape = 'u32[144,128]{1,0:T(1,128)}', space=vmem, size = 0x12000, scoped, tag = 'internal scratch']
  #allocation2 [shape = 'f32[4,128]{1,0:T(4,128)}', space=vmem, size = 0x800, scoped, tag = 'scratch operand']
  %s0 = inlined_call_operand.vmem [shape: f32[2,4,18,18], index: 0, kind: input, shape index: {}]
  %s1 = inlined_call_operand.vmem [shape: f32[9,4,8,1], index: 1, kind: input, shape index: {}]
  %s2 = inlined_call_operand.vmem [shape: f32[4,8,1], index: 2, kind: input, shape index: {}]
  %s3 = inlined_call_operand.vmem [shape: f32[8,4], index: 3, kind: input, shape index: {}]
  %s4 = inlined_call_operand.vmem [shape: f32[8,1], index: 4, kind: input, shape index: {}]
  %s5 = inlined_call_operand.hbm [shape: f32[2,8,256], index: 5, kind: output, shape index: {}]
  %s6 = sld [smem:[#allocation0]]
  $region53: #{tpu_custom_call.1} parent=0
    _
  %s8 = ssub.s32 1, %s6
  %s9 = scalar_select 0, %s8, %s6
  $region1: #{tpu_custom_call.1} parent=0
    #allocation3 [shape = 'u8[8192]{0}', space=vmem, size = 0x2000, scoped, tag = 'output window, operand 0']
    #allocation4 [shape = 's32[2]{0}', space=sflag, size = 0x8, scoped, tag = 'scoped memory for tpu_custom_call.1']
    %10 = vsyncpa [#allocation4], 0
    %s11 = scalar_lea.sflag [#allocation4], 1
    %12 = vsyncpa %s11, 0
    loop: start=0, step=1, limit=6
    $region2: #{tpu_custom_call.1} parent=1 // loop_pre_header
      _
    $region3: #{tpu_custom_call.1} parent=1 // loop_header
      %s14 = sphi 0, %s18
      %p15 = scmp.ge.s32.totalorder %s14, 6
      %s21 = sphi 0, %s33
      %s22 = sphi 0, %s29
      %s23 = sphi 0, %s21
      %s24 = sphi 0, %s22
      %s25 = sphi 0, %s23
      %s26 = sphi 0, %s24
      %s36 = sphi 0, %s38
      %s39 = sphi 0, %s36
      %s40 = sphi 0, %s39
      %s56 = sphi 0, %s40
      %s60 = sphi 0, %s60
      %s62 = sphi 0, %s60
      %s63 = sphi 0, %s62
      %s77 = sphi 0, %s63
      %s81 = sphi 0, %s81
      %s83 = sphi 0, %s81
      %s84 = sphi 0, %s83
      %s98 = sphi 0, %s84
      %s102 = sphi 0, %s102
      %s104 = sphi 0, %s102
      %s105 = sphi 0, %s104
      %s119 = sphi 0, %s105
      %s123 = sphi 0, %s123
      %s125 = sphi 0, %s123
      %s126 = sphi 0, %s125
      %s140 = sphi 0, %s126
      %s148 = sphi 0, %s150
      %s151 = sphi 0, %s148
      %s152 = sphi 0, %s151
      %s168 = sphi 0, %s152
    $region4: #{tpu_custom_call.1} parent=1 // loop_header_branch
      %17 = sbr.rel (%p15) target = $region8
    $region5: #{tpu_custom_call.1} parent=1 // loop_body
      %s19 = ssub.s32 %s14, 1
      %s20 = ssub.s32 %s14, 2
      %s27 = sadd.s32 1, %s22
      %p28 = scmp.ge.s32.totalorder %s27, 2
      %s29 = scalar_select %p28, 0, %s27
      %s30 = sadd.s32 1, %s21
      %s31 = scalar_select %p28, %s30, %s21
      %p32 = scmp.ge.s32.totalorder %s31, 2
      %s33 = scalar_select %p32, 0, %s31
      %s34 = ssub.s32 %s21, %s33
      %p35 = scmp.eq.s32.totalorder %s34, 0
      %s37 = sadd.s32 %s36, 1
      %s38 = scalar_select %p35, %s36, %s37
      %p41 = pneg %p35
      %p42 = scmp.eq.s32.totalorder %s14, 3
      %p43 = por %p41, %p42
      %p44 = scmp.ne.s32.totalorder %s36, %s39
      %p45 = scmp.eq.s32.totalorder %s14, 0
      %p46 = por %p44, %p45
      %p47 = scmp.ne.s32.totalorder %s36, %s39
      %p48 = scmp.eq.s32.totalorder %s19, 3
      %p49 = por %p47, %p48
      %p50 = scmp.ne.s32.totalorder %s39, %s40
      %p51 = scmp.eq.s32.totalorder %s19, 0
      %p52 = por %p50, %p51
      %p53 = scmp.ne.s32.totalorder %s39, %s40
      %p54 = scmp.eq.s32.totalorder %s20, 3
      %p55 = por %p53, %p54
      %p57 = scmp.ne.s32.totalorder %s40, %s56
      %p58 = scmp.eq.s32.totalorder %s20, 0
      %p59 = por %p57, %p58
      %s61 = sadd.s32 %s60, 1
      %p64 = scmp.eq.s32.totalorder %s14, 3
      %p65 = scmp.ne.s32.totalorder %s60, %s62
      %p66 = scmp.eq.s32.totalorder %s14, 0
      %p67 = por %p65, %p66
      %p68 = scmp.ne.s32.totalorder %s60, %s62
      %p69 = scmp.eq.s32.totalorder %s19, 3
      %p70 = por %p68, %p69
      %p71 = scmp.ne.s32.totalorder %s62, %s63
      %p72 = scmp.eq.s32.totalorder %s19, 0
      %p73 = por %p71, %p72
      %p74 = scmp.ne.s32.totalorder %s62, %s63
      %p75 = scmp.eq.s32.totalorder %s20, 3
      %p76 = por %p74, %p75
      %p78 = scmp.ne.s32.totalorder %s63, %s77
      %p79 = scmp.eq.s32.totalorder %s20, 0
      %p80 = por %p78, %p79
      %s82 = sadd.s32 %s81, 1
      %p85 = scmp.eq.s32.totalorder %s14, 3
      %p86 = scmp.ne.s32.totalorder %s81, %s83
      %p87 = scmp.eq.s32.totalorder %s14, 0
      %p88 = por %p86, %p87
      %p89 = scmp.ne.s32.totalorder %s81, %s83
      %p90 = scmp.eq.s32.totalorder %s19, 3
      %p91 = por %p89, %p90
      %p92 = scmp.ne.s32.totalorder %s83, %s84
      %p93 = scmp.eq.s32.totalorder %s19, 0
      %p94 = por %p92, %p93
      %p95 = scmp.ne.s32.totalorder %s83, %s84
      %p96 = scmp.eq.s32.totalorder %s20, 3
      %p97 = por %p95, %p96
      %p99 = scmp.ne.s32.totalorder %s84, %s98
      %p100 = scmp.eq.s32.totalorder %s20, 0
      %p101 = por %p99, %p100
      %s103 = sadd.s32 %s102, 1
      %p106 = scmp.eq.s32.totalorder %s14, 3
      %p107 = scmp.ne.s32.totalorder %s102, %s104
      %p108 = scmp.eq.s32.totalorder %s14, 0
      %p109 = por %p107, %p108
      %p110 = scmp.ne.s32.totalorder %s102, %s104
      %p111 = scmp.eq.s32.totalorder %s19, 3
      %p112 = por %p110, %p111
      %p113 = scmp.ne.s32.totalorder %s104, %s105
      %p114 = scmp.eq.s32.totalorder %s19, 0
      %p115 = por %p113, %p114
      %p116 = scmp.ne.s32.totalorder %s104, %s105
      %p117 = scmp.eq.s32.totalorder %s20, 3
      %p118 = por %p116, %p117
      %p120 = scmp.ne.s32.totalorder %s105, %s119
      %p121 = scmp.eq.s32.totalorder %s20, 0
      %p122 = por %p120, %p121
      %s124 = sadd.s32 %s123, 1
      %p127 = scmp.eq.s32.totalorder %s14, 3
      %p128 = scmp.ne.s32.totalorder %s123, %s125
      %p129 = scmp.eq.s32.totalorder %s14, 0
      %p130 = por %p128, %p129
      %p131 = scmp.ne.s32.totalorder %s123, %s125
      %p132 = scmp.eq.s32.totalorder %s19, 3
      %p133 = por %p131, %p132
      %p134 = scmp.ne.s32.totalorder %s125, %s126
      %p135 = scmp.eq.s32.totalorder %s19, 0
      %p136 = por %p134, %p135
      %p137 = scmp.ne.s32.totalorder %s125, %s126
      %p138 = scmp.eq.s32.totalorder %s20, 3
      %p139 = por %p137, %p138
      %p141 = scmp.ne.s32.totalorder %s126, %s140
      %p142 = scmp.eq.s32.totalorder %s20, 0
      %p143 = por %p141, %p142
      %s144 = ssub.s32 %s21, %s33
      %s145 = ssub.s32 %s22, %s29
      %s146 = sor.u32 %s144, %s145
      %p147 = scmp.eq.s32.totalorder %s146, 0
      %s149 = sadd.s32 %s148, 1
      %s150 = scalar_select %p147, %s148, %s149
      %p153 = pneg %p147
      %p154 = scmp.eq.s32.totalorder %s14, 3
      %p155 = por %p153, %p154
      %p156 = scmp.ne.s32.totalorder %s148, %s151
      %p157 = scmp.eq.s32.totalorder %s14, 0
      %p158 = por %p156, %p157
      %p159 = scmp.ne.s32.totalorder %s148, %s151
      %p160 = scmp.eq.s32.totalorder %s19, 3
      %p161 = por %p159, %p160
      %p162 = scmp.ne.s32.totalorder %s151, %s152
      %p163 = scmp.eq.s32.totalorder %s19, 0
      %p164 = por %p162, %p163
      %p165 = scmp.ne.s32.totalorder %s151, %s152
      %p166 = scmp.eq.s32.totalorder %s20, 3
      %p167 = por %p165, %p166
      %p169 = scmp.ne.s32.totalorder %s152, %s168
      %p170 = scmp.eq.s32.totalorder %s20, 0
      %p171 = por %p169, %p170
      %p172 = scmp.le.s32.totalorder 1, %s14
      %p173 = scmp.lt.s32.totalorder %s14, 5
      %p174 = pnand %p172, %p173
      %p175 = pneg %p174
      // Predicated region
      $region9: #{tpu_custom_call.1} parent=5 // pred_check
        _
      $region10: #{tpu_custom_call.1} parent=5 // pred_check_branch
        %177 = sbr.rel (%p174) target = $region12
      $region11: #{tpu_custom_call.1} parent=5 // pred_region
        %s178 = ssub.s32 %s14, 1
        // Predicated region
        $region13: #{tpu_custom_call.1} parent=11 // pred_check
          %p179 = pneg %p73
        $region14: #{tpu_custom_call.1} parent=11 // pred_check_branch
          %181 = sbr.rel (%p179) target = $region16
        $region15: #{tpu_custom_call.1} parent=11 // pred_region
          _
        $region16: #{tpu_custom_call.1} parent=11 // pred_fallthru
          _
        // Predicated region
        $region17: #{tpu_custom_call.1} parent=11 // pred_check
          %p182 = pneg %p94
        $region18: #{tpu_custom_call.1} parent=11 // pred_check_branch
          %184 = sbr.rel (%p182) target = $region20
        $region19: #{tpu_custom_call.1} parent=11 // pred_region
          _
        $region20: #{tpu_custom_call.1} parent=11 // pred_fallthru
          _
        // Predicated region
        $region21: #{tpu_custom_call.1} parent=11 // pred_check
          %p185 = pneg %p115
        $region22: #{tpu_custom_call.1} parent=11 // pred_check_branch
          %187 = sbr.rel (%p185) target = $region24
        $region23: #{tpu_custom_call.1} parent=11 // pred_region
          _
        $region24: #{tpu_custom_call.1} parent=11 // pred_fallthru
          _
        // Predicated region
        $region25: #{tpu_custom_call.1} parent=11 // pred_check
          %p188 = pneg %p136
        $region26: #{tpu_custom_call.1} parent=11 // pred_check_branch
          %190 = sbr.rel (%p188) target = $region28
        $region27: #{tpu_custom_call.1} parent=11 // pred_region
          _
        $region28: #{tpu_custom_call.1} parent=11 // pred_fallthru
          _
      $region12: #{tpu_custom_call.1} parent=5 // pred_fallthru
        _
      %p191 = scmp.lt.s32.totalorder %s14, 4
      // Predicated region
      $region29: #{tpu_custom_call.1} parent=5 // pred_check
        %p192 = pneg %p191
      $region30: #{tpu_custom_call.1} parent=5 // pred_check_branch
        %194 = sbr.rel (%p192) target = $region32
      $region31: #{tpu_custom_call.1} parent=5 // pred_region
        // Predicated region
        $region33: #{tpu_custom_call.1} parent=31 // pred_check
          %p195 = pneg %p46
        $region34: #{tpu_custom_call.1} parent=31 // pred_check_branch
          %197 = sbr.rel (%p195) target = $region36
        $region35: #{tpu_custom_call.1} parent=31 // pred_region
          %p198 = scmp.lt.s32.totalorder %s21, 1
          %s199 = scalar_select %p198, %s21, 1
          %s200 = smul.addr %s199, 12
          %s201 = smul.addr %s200, 8
          %s202 = scalar_lea.vmem %s0, %s201
        $region36: #{tpu_custom_call.1} parent=31 // pred_fallthru
          _
      $region32: #{tpu_custom_call.1} parent=5 // pred_fallthru
        _
      %p203 = scmp.le.s32.totalorder 1, %s14
      %p204 = scmp.lt.s32.totalorder %s14, 5
      %p205 = pnand %p203, %p204
      %p206 = pneg %p205
      // Predicated region
      $region37: #{tpu_custom_call.1} parent=5 // pred_check
        _
      $region38: #{tpu_custom_call.1} parent=5 // pred_check_branch
        %208 = sbr.rel (%p205) target = $region40
      $region39: #{tpu_custom_call.1} parent=5 // pred_region
        %s209 = ssub.s32 %s14, 1
        %p210 = scmp.lt.s32.totalorder %s23, 1
        %s211 = scalar_select %p210, %s23, 1
        %s212 = smul.addr %s211, 12
        %s213 = smul.addr %s212, 8
        %s214 = scalar_lea.vmem %s0, %s213
        %p215 = pneg %p52
        %p216 = pneg %p49
        %p217 = pneg %p73
        %p218 = pneg %p70
        %p219 = pneg %p94
        %p220 = pneg %p91
        %p221 = pneg %p115
        %p222 = pneg %p112
        %p223 = pneg %p136
        %p224 = pneg %p133
        %p225 = pneg %p164
        %p226 = pneg %p161
        %s227 = sand.u32 %s151, 1
        %s228 = scalar_lea.sflag [#allocation4], %s227
        %s229 = sand.u32 %s151, 1
        %s230 = smul.addr %s229, 8
        %s231 = scalar_lea.vmem [#allocation3], %s230
        %p232 = scmp.lt.s32.totalorder %s23, 1
        %s233 = scalar_select %p232, %s23, 1
        %s234 = smul.addr %s233, 12
        %s235 = smul.addr %s234, 8
        %s236 = scalar_lea.vmem %s0, %s235
        %s237 = smul.u32 %s24, 8
        %s238 = scalar_lea.vmem %s236, %s237
        %v239 = vld [vmem:[%s238] sm:$0xff]
        %v240 = vld [vmem:[%s238 + $0x18] sm:$0xff]
        %v241 = vld [vmem:[%s238 + $0x30] sm:$0xff]
        %v242 = vld [vmem:[%s238 + $0x48] sm:$0xff]
        %v243 = vld [vmem:[%s1] sm:$0xff]
        %v244 = vld [vmem:[%s1 + $0x8] sm:$0xff]
        %v245 = vld [vmem:[%s1 + $0x10] sm:$0xff]
        %v246 = vld [vmem:[%s1 + $0x18] sm:$0xff]
        %248 = vset.pattern.permute.xlu0 0
        %249 = vperm.xlu0 %248, %v243
        %v250 = vpop.permute.xlu0 %249
        %253 = vset.pattern.permute.xlu0 0
        %254 = vperm.xlu0 %253, %v244
        %v255 = vpop.permute.xlu0 %254
        %258 = vset.pattern.permute.xlu0 0
        %259 = vperm.xlu0 %258, %v245
        %v260 = vpop.permute.xlu0 %259
        %263 = vset.pattern.permute.xlu0 0
        %264 = vperm.xlu0 %263, %v246
        %v265 = vpop.permute.xlu0 %264
        %v267 = vmul.f32 %v239, %v250
        %v268 = vmul.f32 %v240, %v255
        %v269 = vmul.f32 %v241, %v260
        %v270 = vmul.f32 %v242, %v265
        %v271 = vadd.f32 %v267, 0.0
        %v272 = vadd.f32 %v268, 0.0
        %v273 = vadd.f32 %v269, 0.0
        %v274 = vadd.f32 %v270, 0.0
        %s275 = scalar_lea.vmem %s1, 32
        %v276 = vld [vmem:[%s275] sm:$0xff]
        %v277 = vld [vmem:[%s275 + $0x8] sm:$0xff]
        %v278 = vld [vmem:[%s275 + $0x10] sm:$0xff]
        %v279 = vld [vmem:[%s275 + $0x18] sm:$0xff]
        %281 = vset.pattern.permute.xlu0 0
        %282 = vperm.xlu0 %281, %v276
        %v283 = vpop.permute.xlu0 %282
        %286 = vset.pattern.permute.xlu0 0
        %287 = vperm.xlu0 %286, %v277
        %v288 = vpop.permute.xlu0 %287
        %291 = vset.pattern.permute.xlu0 0
        %292 = vperm.xlu0 %291, %v278
        %v293 = vpop.permute.xlu0 %292
        %296 = vset.pattern.permute.xlu0 0
        %297 = vperm.xlu0 %296, %v279
        %v298 = vpop.permute.xlu0 %297
        %v300 = vmul.f32 %v239, %v283
        %v301 = vmul.f32 %v240, %v288
        %v302 = vmul.f32 %v241, %v293
        %v303 = vmul.f32 %v242, %v298
        %308 = vrot.lane.b32.xlu0 %v300, 127
        %v309 = vpop.permute.xlu0 %308
        %310 = vrot.lane.b32.xlu0 %v301, 127
        %v311 = vpop.permute.xlu0 %310
        %312 = vrot.lane.b32.xlu0 %v302, 127
        %v313 = vpop.permute.xlu0 %312
        %314 = vrot.lane.b32.xlu0 %v303, 127
        %v315 = vpop.permute.xlu0 %314
        %v320 = vadd.f32 %v271, %v309
        %v321 = vadd.f32 %v272, %v311
        %v322 = vadd.f32 %v273, %v313
        %v323 = vadd.f32 %v274, %v315
        %s324 = scalar_lea.vmem %s1, 64
        %v325 = vld [vmem:[%s324] sm:$0xff]
        %v326 = vld [vmem:[%s324 + $0x8] sm:$0xff]
        %v327 = vld [vmem:[%s324 + $0x10] sm:$0xff]
        %v328 = vld [vmem:[%s324 + $0x18] sm:$0xff]
        %330 = vset.pattern.permute.xlu0 0
        %331 = vperm.xlu0 %330, %v325
        %v332 = vpop.permute.xlu0 %331
        %335 = vset.pattern.permute.xlu0 0
        %336 = vperm.xlu0 %335, %v326
        %v337 = vpop.permute.xlu0 %336
        %340 = vset.pattern.permute.xlu0 0
        %341 = vperm.xlu0 %340, %v327
        %v342 = vpop.permute.xlu0 %341
        %345 = vset.pattern.permute.xlu0 0
        %346 = vperm.xlu0 %345, %v328
        %v347 = vpop.permute.xlu0 %346
        %v349 = vmul.f32 %v239, %v332
        %v350 = vmul.f32 %v240, %v337
        %v351 = vmul.f32 %v241, %v342
        %v352 = vmul.f32 %v242, %v347
        %357 = vrot.lane.b32.xlu0 %v349, 126
        %v358 = vpop.permute.xlu0 %357
        %359 = vrot.lane.b32.xlu0 %v350, 126
        %v360 = vpop.permute.xlu0 %359
        %361 = vrot.lane.b32.xlu0 %v351, 126
        %v362 = vpop.permute.xlu0 %361
        %363 = vrot.lane.b32.xlu0 %v352, 126
        %v364 = vpop.permute.xlu0 %363
        %v369 = vadd.f32 %v320, %v358
        %v370 = vadd.f32 %v321, %v360
        %v371 = vadd.f32 %v322, %v362
        %v372 = vadd.f32 %v323, %v364
        %s373 = sadd.s32 %s237, 1
        %s374 = scalar_lea.vmem %s236, %s373
        %v375 = vld [vmem:[%s374] sm:$0xff]
        %v376 = vld [vmem:[%s374 + $0x18] sm:$0xff]
        %v377 = vld [vmem:[%s374 + $0x30] sm:$0xff]
        %v378 = vld [vmem:[%s374 + $0x48] sm:$0xff]
        %s379 = scalar_lea.vmem %s1, 96
        %v380 = vld [vmem:[%s379] sm:$0xff]
        %v381 = vld [vmem:[%s379 + $0x8] sm:$0xff]
        %v382 = vld [vmem:[%s379 + $0x10] sm:$0xff]
        %v383 = vld [vmem:[%s379 + $0x18] sm:$0xff]
        %385 = vset.pattern.permute.xlu0 0
        %386 = vperm.xlu0 %385, %v380
        %v387 = vpop.permute.xlu0 %386
        %390 = vset.pattern.permute.xlu0 0
        %391 = vperm.xlu0 %390, %v381
        %v392 = vpop.permute.xlu0 %391
        %395 = vset.pattern.permute.xlu0 0
        %396 = vperm.xlu0 %395, %v382
        %v397 = vpop.permute.xlu0 %396
        %400 = vset.pattern.permute.xlu0 0
        %401 = vperm.xlu0 %400, %v383
        %v402 = vpop.permute.xlu0 %401
        %v404 = vmul.f32 %v375, %v387
        %v405 = vmul.f32 %v376, %v392
        %v406 = vmul.f32 %v377, %v397
        %v407 = vmul.f32 %v378, %v402
        %v408 = vadd.f32 %v369, %v404
        %v409 = vadd.f32 %v370, %v405
        %v410 = vadd.f32 %v371, %v406
        %v411 = vadd.f32 %v372, %v407
        %s412 = scalar_lea.vmem %s1, 128
        %v413 = vld [vmem:[%s412] sm:$0xff]
        %v414 = vld [vmem:[%s412 + $0x8] sm:$0xff]
        %v415 = vld [vmem:[%s412 + $0x10] sm:$0xff]
        %v416 = vld [vmem:[%s412 + $0x18] sm:$0xff]
        %418 = vset.pattern.permute.xlu0 0
        %419 = vperm.xlu0 %418, %v413
        %v420 = vpop.permute.xlu0 %419
        %423 = vset.pattern.permute.xlu0 0
        %424 = vperm.xlu0 %423, %v414
        %v425 = vpop.permute.xlu0 %424
        %428 = vset.pattern.permute.xlu0 0
        %429 = vperm.xlu0 %428, %v415
        %v430 = vpop.permute.xlu0 %429
        %433 = vset.pattern.permute.xlu0 0
        %434 = vperm.xlu0 %433, %v416
        %v435 = vpop.permute.xlu0 %434
        %v437 = vmul.f32 %v375, %v420
        %v438 = vmul.f32 %v376, %v425
        %v439 = vmul.f32 %v377, %v430
        %v440 = vmul.f32 %v378, %v435
        %445 = vrot.lane.b32.xlu0 %v437, 127
        %v446 = vpop.permute.xlu0 %445
        %447 = vrot.lane.b32.xlu0 %v438, 127
        %v448 = vpop.permute.xlu0 %447
        %449 = vrot.lane.b32.xlu0 %v439, 127
        %v450 = vpop.permute.xlu0 %449
        %451 = vrot.lane.b32.xlu0 %v440, 127
        %v452 = vpop.permute.xlu0 %451
        %v457 = vadd.f32 %v408, %v446
        %v458 = vadd.f32 %v409, %v448
        %v459 = vadd.f32 %v410, %v450
        %v460 = vadd.f32 %v411, %v452
        %s461 = scalar_lea.vmem %s1, 160
        %v462 = vld [vmem:[%s461] sm:$0xff]
        %v463 = vld [vmem:[%s461 + $0x8] sm:$0xff]
        %v464 = vld [vmem:[%s461 + $0x10] sm:$0xff]
        %v465 = vld [vmem:[%s461 + $0x18] sm:$0xff]
        %467 = vset.pattern.permute.xlu0 0
        %468 = vperm.xlu0 %467, %v462
        %v469 = vpop.permute.xlu0 %468
        %472 = vset.pattern.permute.xlu0 0
        %473 = vperm.xlu0 %472, %v463
        %v474 = vpop.permute.xlu0 %473
        %477 = vset.pattern.permute.xlu0 0
        %478 = vperm.xlu0 %477, %v464
        %v479 = vpop.permute.xlu0 %478
        %482 = vset.pattern.permute.xlu0 0
        %483 = vperm.xlu0 %482, %v465
        %v484 = vpop.permute.xlu0 %483
        %v486 = vmul.f32 %v375, %v469
        %v487 = vmul.f32 %v376, %v474
        %v488 = vmul.f32 %v377, %v479
        %v489 = vmul.f32 %v378, %v484
        %494 = vrot.lane.b32.xlu0 %v486, 126
        %v495 = vpop.permute.xlu0 %494
        %496 = vrot.lane.b32.xlu0 %v487, 126
        %v497 = vpop.permute.xlu0 %496
        %498 = vrot.lane.b32.xlu0 %v488, 126
        %v499 = vpop.permute.xlu0 %498
        %500 = vrot.lane.b32.xlu0 %v489, 126
        %v501 = vpop.permute.xlu0 %500
        %v506 = vadd.f32 %v457, %v495
        %v507 = vadd.f32 %v458, %v497
        %v508 = vadd.f32 %v459, %v499
        %v509 = vadd.f32 %v460, %v501
        %s510 = sadd.s32 %s237, 2
        %s511 = scalar_lea.vmem %s236, %s510
        %v512 = vld [vmem:[%s511] sm:$0xff]
        %v513 = vld [vmem:[%s511 + $0x18] sm:$0xff]
        %v514 = vld [vmem:[%s511 + $0x30] sm:$0xff]
        %v515 = vld [vmem:[%s511 + $0x48] sm:$0xff]
        %s516 = scalar_lea.vmem %s1, 192
        %v517 = vld [vmem:[%s516] sm:$0xff]
        %v518 = vld [vmem:[%s516 + $0x8] sm:$0xff]
        %v519 = vld [vmem:[%s516 + $0x10] sm:$0xff]
        %v520 = vld [vmem:[%s516 + $0x18] sm:$0xff]
        %522 = vset.pattern.permute.xlu0 0
        %523 = vperm.xlu0 %522, %v517
        %v524 = vpop.permute.xlu0 %523
        %527 = vset.pattern.permute.xlu0 0
        %528 = vperm.xlu0 %527, %v518
        %v529 = vpop.permute.xlu0 %528
        %532 = vset.pattern.permute.xlu0 0
        %533 = vperm.xlu0 %532, %v519
        %v534 = vpop.permute.xlu0 %533
        %537 = vset.pattern.permute.xlu0 0
        %538 = vperm.xlu0 %537, %v520
        %v539 = vpop.permute.xlu0 %538
        %v541 = vmul.f32 %v512, %v524
        %v542 = vmul.f32 %v513, %v529
        %v543 = vmul.f32 %v514, %v534
        %v544 = vmul.f32 %v515, %v539
        %v545 = vadd.f32 %v506, %v541
        %v546 = vadd.f32 %v507, %v542
        %v547 = vadd.f32 %v508, %v543
        %v548 = vadd.f32 %v509, %v544
        %s549 = scalar_lea.vmem %s1, 224
        %v550 = vld [vmem:[%s549] sm:$0xff]
        %v551 = vld [vmem:[%s549 + $0x8] sm:$0xff]
        %v552 = vld [vmem:[%s549 + $0x10] sm:$0xff]
        %v553 = vld [vmem:[%s549 + $0x18] sm:$0xff]
        %555 = vset.pattern.permute.xlu0 0
        %556 = vperm.xlu0 %555, %v550
        %v557 = vpop.permute.xlu0 %556
        %560 = vset.pattern.permute.xlu0 0
        %561 = vperm.xlu0 %560, %v551
        %v562 = vpop.permute.xlu0 %561
        %565 = vset.pattern.permute.xlu0 0
        %566 = vperm.xlu0 %565, %v552
        %v567 = vpop.permute.xlu0 %566
        %570 = vset.pattern.permute.xlu0 0
        %571 = vperm.xlu0 %570, %v553
        %v572 = vpop.permute.xlu0 %571
        %v574 = vmul.f32 %v512, %v557
        %v575 = vmul.f32 %v513, %v562
        %v576 = vmul.f32 %v514, %v567
        %v577 = vmul.f32 %v515, %v572
        %582 = vrot.lane.b32.xlu0 %v574, 127
        %v583 = vpop.permute.xlu0 %582
        %584 = vrot.lane.b32.xlu0 %v575, 127
        %v585 = vpop.permute.xlu0 %584
        %586 = vrot.lane.b32.xlu0 %v576, 127
        %v587 = vpop.permute.xlu0 %586
        %588 = vrot.lane.b32.xlu0 %v577, 127
        %v589 = vpop.permute.xlu0 %588
        %v594 = vadd.f32 %v545, %v583
        %v595 = vadd.f32 %v546, %v585
        %v596 = vadd.f32 %v547, %v587
        %v597 = vadd.f32 %v548, %v589
        %s598 = scalar_lea.vmem %s1, 256
        %v599 = vld [vmem:[%s598] sm:$0xff]
        %v600 = vld [vmem:[%s598 + $0x8] sm:$0xff]
        %v601 = vld [vmem:[%s598 + $0x10] sm:$0xff]
        %v602 = vld [vmem:[%s598 + $0x18] sm:$0xff]
        %604 = vset.pattern.permute.xlu0 0
        %605 = vperm.xlu0 %604, %v599
        %v606 = vpop.permute.xlu0 %605
        %609 = vset.pattern.permute.xlu0 0
        %610 = vperm.xlu0 %609, %v600
        %v611 = vpop.permute.xlu0 %610
        %614 = vset.pattern.permute.xlu0 0
        %615 = vperm.xlu0 %614, %v601
        %v616 = vpop.permute.xlu0 %615
        %619 = vset.pattern.permute.xlu0 0
        %620 = vperm.xlu0 %619, %v602
        %v621 = vpop.permute.xlu0 %620
        %v623 = vmul.f32 %v512, %v606
        %v624 = vmul.f32 %v513, %v611
        %v625 = vmul.f32 %v514, %v616
        %v626 = vmul.f32 %v515, %v621
        %631 = vrot.lane.b32.xlu0 %v623, 126
        %v632 = vpop.permute.xlu0 %631
        %633 = vrot.lane.b32.xlu0 %v624, 126
        %v634 = vpop.permute.xlu0 %633
        %635 = vrot.lane.b32.xlu0 %v625, 126
        %v636 = vpop.permute.xlu0 %635
        %637 = vrot.lane.b32.xlu0 %v626, 126
        %v638 = vpop.permute.xlu0 %637
        %v643 = vadd.f32 %v594, %v632
        %v644 = vadd.f32 %v595, %v634
        %v645 = vadd.f32 %v596, %v636
        %v646 = vadd.f32 %v597, %v638
        %v647 = vld [vmem:[%s2] sm:$0xff]
        %v648 = vld [vmem:[%s2 + $0x8] sm:$0xff]
        %v649 = vld [vmem:[%s2 + $0x10] sm:$0xff]
        %v650 = vld [vmem:[%s2 + $0x18] sm:$0xff]
        %652 = vset.pattern.permute.xlu0 0
        %653 = vperm.xlu0 %652, %v647
        %v654 = vpop.permute.xlu0 %653
        %657 = vset.pattern.permute.xlu0 0
        %658 = vperm.xlu0 %657, %v648
        %v659 = vpop.permute.xlu0 %658
        %662 = vset.pattern.permute.xlu0 0
        %663 = vperm.xlu0 %662, %v649
        %v664 = vpop.permute.xlu0 %663
        %667 = vset.pattern.permute.xlu0 0
        %668 = vperm.xlu0 %667, %v650
        %v669 = vpop.permute.xlu0 %668
        %v671 = vadd.f32 %v643, %v654
        %v672 = vadd.f32 %v644, %v659
        %v673 = vadd.f32 %v645, %v664
        %v674 = vadd.f32 %v646, %v669
        %v679 = vrot.slane %v672, 7
        %vm680 = vcmask 1041409
        %v681 = vsel %vm680, %v679, %v671
        %v682 = vrot.slane %v673, 6
        %vm683 = vcmask 1042434
        %v684 = vsel %vm683, %v682, %v681
        %v685 = vrot.slane %v674, 5
        %vm686 = vcmask 1043459
        %v687 = vsel %vm686, %v685, %v684
        %vm689 = vcmask 125952
        %690 = vst.msk [vmem:[#allocation2] sm:$0xf] %vm689, %v687
        %v691 = vsel %vm683, %v679, %v671
        %v692 = vsel %vm686, %v682, %v691
        %vm693 = vcmask 1044484
        %v694 = vsel %vm693, %v685, %v692
        %695 = vrot.lane.b32.xlu0 %v694, 16
        %v696 = vpop.permute.xlu0 %695
        %vm698 = vcmask 258177
        %699 = vst.msk [vmem:[#allocation2 - $0x1] sm:$0x1e] %vm698, %v696
        %v700 = vsel %vm686, %v679, %v671
        %v701 = vsel %vm693, %v682, %v700
        %vm702 = vcmask 1045509
        %v703 = vsel %vm702, %v685, %v701
        %704 = vrot.lane.b32.xlu0 %v703, 32
        %v705 = vpop.permute.xlu0 %704
        %vm707 = vcmask 390402
        %708 = vst.msk [vmem:[#allocation2 - $0x2] sm:$0x3c] %vm707, %v705
        %v709 = vsel %vm693, %v679, %v671
        %v710 = vsel %vm702, %v682, %v709
        %vm711 = vcmask 1046534
        %v712 = vsel %vm711, %v685, %v710
        %713 = vrot.lane.b32.xlu0 %v712, 48
        %v714 = vpop.permute.xlu0 %713
        %vm716 = vcmask 522627
        %717 = vst.msk [vmem:[#allocation2 - $0x3] sm:$0x78] %vm716, %v714
        %v718 = vsel %vm702, %v679, %v671
        %v719 = vsel %vm711, %v682, %v718
        %vm720 = vcmask 1047559
        %v721 = vsel %vm720, %v685, %v719
        %722 = vrot.lane.b32.xlu0 %v721, 64
        %v723 = vpop.permute.xlu0 %722
        %vm725 = vcmask 654852
        %726 = vst.msk [vmem:[#allocation2 - $0x4] sm:$0xf0] %vm725, %v723
        %v727 = vsel %vm711, %v679, %v671
        %v728 = vsel %vm720, %v682, %v727
        %729 = vrot.lane.b32.xlu0 %v728, 80
        %v730 = vpop.permute.xlu0 %729
        %731 = vrot.lane.b32.xlu0 %v685, 80
        %v732 = vpop.permute.xlu0 %731
        %vm735 = vcmask 786053
        %736 = vst.msk [vmem:[#allocation2 - $0x5] sm:$0xe0] %vm735, %v730
        %vm737 = vcmask 778880
        %738 = vst.msk [vmem:[#allocation2 + $0x3] sm:$0x1] %vm737, %v732
        %v739 = vsel %vm720, %v679, %v671
        %v740 = vsel %vm680, %v685, %v682
        %741 = vrot.lane.b32.xlu0 %v739, 96
        %v742 = vpop.permute.xlu0 %741
        %743 = vrot.lane.b32.xlu0 %v740, 96
        %v744 = vpop.permute.xlu0 %743
        %vm747 = vcmask 917254
        %748 = vst.msk [vmem:[#allocation2 - $0x6] sm:$0xc0] %vm747, %v742
        %vm749 = vcmask 911104
        %750 = vst.msk [vmem:[#allocation2 + $0x2] sm:$0x3] %vm749, %v744
        %v751 = vsel %vm680, %v682, %v679
        %v752 = vsel %vm683, %v685, %v751
        %753 = vrot.lane.b32.xlu0 %v671, 112
        %v754 = vpop.permute.xlu0 %753
        %755 = vrot.lane.b32.xlu0 %v752, 112
        %v756 = vpop.permute.xlu0 %755
        %vm759 = vcmask 1048455
        %760 = vst.msk [vmem:[#allocation2 - $0x7] sm:$0x80] %vm759, %v754
        %vm761 = vcmask 1043328
        %762 = vst.msk [vmem:[#allocation2 + $0x1] sm:$0x7] %vm761, %v756
        %v763 = vld [vmem:[%s3] sm:$0xff]
        %v764 = vld [vmem:[#allocation2] sm:$0xf]
        %v765 = vld [vmem:[%s4] sm:$0xff]
        %767 = vset.pattern.permute.xlu0 0
        %768 = vperm.xlu0 %767, %v765
        %v769 = vpop.permute.xlu0 %768
        %vm771 = vcmask 31744
        %v773 = vsel %vm771, %v763, 0
        %vm775 = vcmask 1043456
        %v777 = vsel %vm775, %v764, 0
        %779 = vmatprep.subr.mxu0 0.0
        %780 = vmatpush1.msra.mxu0 %v777
        %781 = vmatprep.subr.mxu0 0.0
        %782 = vmatpush1.msra.mxu0 0.0
        %783 = vmatprep.subr.mxu0 0.0
        %784 = vmatpush1.msra.mxu0 0.0
        %785 = vmatprep.subr.mxu0 0.0
        %786 = vmatpush1.msra.mxu0 0.0
        %787 = vmatprep.subr.mxu0 0.0
        %788 = vmatpush1.msra.mxu0 0.0
        %789 = vmatprep.subr.mxu0 0.0
        %790 = vmatpush1.msra.mxu0 0.0
        %791 = vmatprep.subr.mxu0 0.0
        %792 = vmatpush1.msra.mxu0 0.0
        %793 = vmatprep.subr.mxu0 0.0
        %794 = vmatpush1.msra.mxu0 0.0
        %795 = vmatprep.subr.mxu0 0.0
        %796 = vmatpush1.msra.mxu0 0.0
        %797 = vmatprep.subr.mxu0 0.0
        %798 = vmatpush1.msra.mxu0 0.0
        %799 = vmatprep.subr.mxu0 0.0
        %800 = vmatpush1.msra.mxu0 0.0
        %801 = vmatprep.subr.mxu0 0.0
        %802 = vmatpush1.msra.mxu0 0.0
        %803 = vmatprep.subr.mxu0 0.0
        %804 = vmatpush1.msra.mxu0 0.0
        %805 = vmatprep.subr.mxu0 0.0
        %806 = vmatpush1.msra.mxu0 0.0
        %807 = vmatprep.subr.mxu0 0.0
        %808 = vmatpush1.msra.mxu0 0.0
        %809 = vmatprep.subr.mxu0 0.0
        %810 = vmatpush1.msra.mxu0 0.0
        %811 = vmatprep.subr.mxu0 0.0
        %812 = vmatpush1.msra.mxu0 0.0
        %813 = vmatprep.subr.mxu0 0.0
        %814 = vmatpush1.msra.mxu0 0.0
        %815 = vmatprep.subr.mxu0 0.0
        %816 = vmatpush1.msra.mxu0 0.0
        %817 = vmatprep.subr.mxu0 0.0
        %818 = vmatpush1.msra.mxu0 0.0
        %819 = vmatprep.subr.mxu0 0.0
        %820 = vmatpush1.msra.mxu0 0.0
        %821 = vmatprep.subr.mxu0 0.0
        %822 = vmatpush1.msra.mxu0 0.0
        %823 = vmatprep.subr.mxu0 0.0
        %824 = vmatpush1.msra.mxu0 0.0
        %825 = vmatprep.subr.mxu0 0.0
        %826 = vmatpush1.msra.mxu0 0.0
        %827 = vmatprep.subr.mxu0 0.0
        %828 = vmatpush1.msra.mxu0 0.0
        %829 = vmatprep.subr.mxu0 0.0
        %830 = vmatpush1.msra.mxu0 0.0
        %831 = vmatprep.subr.mxu0 0.0
        %832 = vmatpush1.msra.mxu0 0.0
        %833 = vmatprep.subr.mxu0 0.0
        %834 = vmatpush1.msra.mxu0 0.0
        %835 = vmatprep.subr.mxu0 0.0
        %836 = vmatpush1.msra.mxu0 0.0
        %837 = vmatprep.subr.mxu0 0.0
        %838 = vmatpush1.msra.mxu0 0.0
        %839 = vmatprep.subr.mxu0 0.0
        %840 = vmatpush1.msra.mxu0 0.0
        %841 = vmatprep.subr.mxu0 0.0
        %842 = vmatpush1.msra.mxu0 0.0
        %843 = vmatprep.mubr.f32.mxu0 0.0
        %844 = vmatmul.mubr.f32.gmra.mrb[0].mxu0 %v773
        %v845 = vpop.f32.mrb[0].mxu0
        %v846 = vadd.f32 %v769, %v845
        %v847 = vpop.f32.mrb[0].mxu0
        %848 = vdwg.mxu0
        %849 = vst [vmem:[%s231] sm:$0xff] %v846
        %s850 = sand.u32 %s151, 1
        %s851 = scalar_lea.sflag [#allocation4], %s850
        %s852 = sand.u32 %s151, 1
        %s853 = smul.addr %s852, 8
        %s854 = scalar_lea.vmem [#allocation3], %s853
        // Predicated region
        $region41: #{tpu_custom_call.1} parent=39 // pred_check
          %p855 = pneg %p161
        $region42: #{tpu_custom_call.1} parent=39 // pred_check_branch
          %857 = sbr.rel (%p855) target = $region44
        $region43: #{tpu_custom_call.1} parent=39 // pred_region
          %s859 = ssub.s32 128, 128
          %860 = vsyncadd %s851, %s859
          %s861 = smul.addr %s23, 2
          %s862 = sadd.s32 %s24, %s861
          %s863 = smul.addr %s862, 128
          %s864 = scalar_lea.hbm %s5, %s863
          %s866 = sshll.u32 %s854, 4
          %s867 = int_to_ptr.vmem [resolvable:$true] %s866
          %869 = dma.vmem_to_hbm [thread:$0]  %s867, 128, %s864, %s851
        $region44: #{tpu_custom_call.1} parent=39 // pred_fallthru
          _
      $region40: #{tpu_custom_call.1} parent=5 // pred_fallthru
        _
      %p870 = scmp.le.s32.totalorder 2, %s14
      // Predicated region
      $region45: #{tpu_custom_call.1} parent=5 // pred_check
        %p871 = pneg %p870
      $region46: #{tpu_custom_call.1} parent=5 // pred_check_branch
        %873 = sbr.rel (%p871) target = $region48
      $region47: #{tpu_custom_call.1} parent=5 // pred_region
        %s874 = ssub.s32 %s14, 2
        // Predicated region
        $region49: #{tpu_custom_call.1} parent=47 // pred_check
          %p875 = pneg %p167
        $region50: #{tpu_custom_call.1} parent=47 // pred_check_branch
          %877 = sbr.rel (%p875) target = $region52
        $region51: #{tpu_custom_call.1} parent=47 // pred_region
          %s878 = sand.u32 %s152, 1
          %s879 = scalar_lea.sflag [#allocation4], %s878
          %s880 = sand.u32 %s152, 1
          %s881 = smul.addr %s880, 8
          %s882 = scalar_lea.vmem [#allocation3], %s881
          %883 = dma.done %s879, 128
        $region52: #{tpu_custom_call.1} parent=47 // pred_fallthru
          _
      $region48: #{tpu_custom_call.1} parent=5 // pred_fallthru
        _
    $region6: #{tpu_custom_call.1} parent=1 // loop_footer
      %s18 = sadd.s32 1, %s14
    $region7: #{tpu_custom_call.1} parent=1 // loop_footer_branch
      %13 = sbr.rel target = $region3
    $region8: #{tpu_custom_call.1} parent=1 // loop_exit
      _
    %884 = vsyncpa [#allocation4], 1
    %s885 = scalar_lea.sflag [#allocation4], 1
    %886 = vsyncpa %s885, 1

</llo_original>
